<compile_context>
chip_gen: v6e
topology: v6e:2x2x1
jax: 0.10.0
libtpu: 0.0.40
codegen_flags: <defaults>
</compile_context>

<pallas_src>
import math

import jax
import jax.numpy as jnp
from jax.experimental import pallas as pl
from jax.experimental.pallas import tpu as pltpu


def _adaptive_windows(in_size: int, out_size: int):
    """Window [start, end) per output index, matching torch.nn.AdaptiveMaxPool2d."""
    starts = [(i * in_size) // out_size for i in range(out_size)]
    ends = [math.ceil(((i + 1) * in_size) / out_size) for i in range(out_size)]
    return starts, ends


def _vmem_budget_and_limit():
    """Generation-aware (v5e/v6e: 128 MiB, v7x: 64 MiB) block budget + VMEM limit."""
    try:
        cap = int(pltpu.get_tpu_info().vmem_capacity_bytes)
    except Exception:
        cap = 64 << 20  # conservative fallback (v7x-sized)
    # Live VMEM per step ~= 2x block (double-buffered input) + ~2x block
    # (loaded value + its in-kernel transpose) + tiny outputs.
    return cap // 12, cap // 2


def _pick_tile_c(B, C, HW, itemsize, budget_bytes):
    """Channel tile: divisor of C, multiple of 8 (sublane granule) or == C, fits budget."""
    divisors = [d for d in range(1, C + 1) if C % d == 0]
    valid = sorted({d for d in divisors if d % 8 == 0} | {C})
    fits = [d for d in valid if d * HW * itemsize <= budget_bytes]
    tile = max(fits) if fits else min(valid)
    # v7x has 2 TensorCores per chip: keep >= 2 steps on the parallel grid if possible.
    if B * (C // tile) < 2:
        smaller = [d for d in valid if d < C and d * HW * itemsize <= budget_bytes]
        if smaller:
            tile = max(smaller)
    return tile


def _make_spp_kernel(H, W, c_tile, levels):
    """Kernel computing all pyramid levels for one (1, c_tile, H*W) NCHW block."""
    # Finest levels first so coarser ones can be derived from them (exact for the
    # adaptive floor/ceil rule whenever the fine size is a multiple of the coarse).
    order = sorted(range(len(levels)), key=lambda k: -(levels[k][0] * levels[k][1]))
    windows = {
        (oh, ow): (_adaptive_windows(H, oh), _adaptive_windows(W, ow))
        for (oh, ow) in set(levels)
    }

    def compute_from_input(xt, oh, ow):
        # xt: (H*W, c_tile) — channels dense on lanes, h-major flat spatial on sublanes.
        (hs, he), (ws, we) = windows[(oh, ow)]
        cells = []
        for i in range(oh):
            # Reduce over the h-window with whole-row (W, c_tile) slab maxima (VPU).
            band = xt[hs[i] * W:(hs[i] + 1) * W, :]
            for h in range(hs[i] + 1, he[i]):
                band = jnp.maximum(band, xt[h * W:(h + 1) * W, :])        # (W, c_tile)
            for j in range(ow):
                cells.append(jnp.max(band[ws[j]:we[j], :], axis=0, keepdims=True))
        return jnp.concatenate(cells, axis=0)            # (oh*ow, c_tile), row-major cells

    def derive_from_parent(pg, poh, pow_, oh, ow):
        # Valid whenever poh % oh == 0 and pow_ % ow == 0: each coarse adaptive
        # window is exactly the union of its nested fine windows.
        kh, kw = poh // oh, pow_ // ow
        cells = []
        for i in range(oh):
            for j in range(ow):
                cell = None
                for r in range(kh):
                    base = (i * kh + r) * pow_ + j * kw
                    for s in range(kw):
                        prow = pg[base + s:base + s + 1, :]              # (1, c_tile)
                        cell = prow if cell is None else jnp.maximum(cell, prow)
                cells.append(cell)
        return jnp.concatenate(cells, axis=0)            # (oh*ow, c_tile)

    def kernel(x_ref, *out_refs):
        x = x_ref[0]                       # (c_tile, H*W) — raw NCHW layout of the block
        xt = jnp.transpose(x)              # (H*W, c_tile): one XLU pass, hides under DMA
        grids = {}                         # (oh, ow) -> (oh*ow, c_tile) level grid in vregs
        for idx in order:
            oh, ow = levels[idx]
            if (oh, ow) in grids:
                g = grids[(oh, ow)]
            else:
                parent = None
                for (poh, pow_) in grids:
                    if (poh, pow_) != (oh, ow) and poh % oh == 0 and pow_ % ow == 0:
                        if parent is None or poh * pow_ < parent[0] * parent[1]:
                            parent = (poh, pow_)
                if parent is not None:
                    g = derive_from_parent(grids[parent], parent[0], parent[1], oh, ow)
                else:
                    g = compute_from_input(xt, oh, ow)
                grids[(oh, ow)] = g
            # Store as (1, c_tile, oh*ow): channels back on sublanes -> output is already
            # in PyTorch (C, oh, ow)-major flatten order; tiny transpose is near-free.
            out = jnp.transpose(g).astype(out_refs[idx].dtype)           # (c_tile, oh*ow)
            out_refs[idx][...] = out.reshape(1, c_tile, oh * ow)

    return kernel


def spp_forward(x, pyramid_configuration):
    """Fused SPP forward: x is NCHW, returns (B, C * sum(oh*ow)) in PyTorch flatten order."""
    pc = [tuple(int(v) for v in s) for s in pyramid_configuration]
    B, C, H, W = x.shape
    HW = H * W
    itemsize = jnp.dtype(x.dtype).itemsize
    block_budget, vmem_limit = _vmem_budget_and_limit()
    tile_c = _pick_tile_c(B, C, HW, itemsize, block_budget)

    # Free view of the NCHW input — no HBM relayout before the kernel.
    x2 = x.reshape(B, C, HW)

    kernel = _make_spp_kernel(H, W, tile_c, pc)
    out_shapes = tuple(
        jax.ShapeDtypeStruct((B, C, oh * ow), x.dtype) for (oh, ow) in pc
    )
    out_specs = tuple(
        pl.BlockSpec((1, tile_c, oh * ow), lambda b, c: (b, c, 0)) for (oh, ow) in pc
    )

    outs = pl.pallas_call(
        kernel,
        out_shape=out_shapes,
        grid=(B, C // tile_c),
        in_specs=[pl.BlockSpec((1, tile_c, HW), lambda b, c: (b, c, 0))],
        out_specs=out_specs,
        compiler_params=pltpu.CompilerParams(
            dimension_semantics=("parallel", "parallel"),
            vmem_limit_bytes=int(vmem_limit),
        ),
    )(x2)
    if not isinstance(outs, (tuple, list)):
        outs = (outs,)

    # (B, C, oh*ow).reshape(B, -1) is already PyTorch's per-level flatten order.
    return jnp.concatenate([o.reshape(B, -1) for o in outs], axis=1)


class SPP:
    """JAX/Pallas equivalent of the PyTorch SPP module (no learnable params)."""

    def __init__(self, pyramid_configuration):
        self.pc = [tuple(s) for s in pyramid_configuration]
        self.output_size = sum(s[0] * s[1] for s in self.pc)

    def __call__(self, x):
        return spp_forward(x, self.pc)


def _reference_spp(x, pyramid_configuration):
    """Pure-JAX reference reproducing AdaptiveMaxPool2d + flatten + concat semantics."""
    B, C, H, W = x.shape
    outs = []
    for (oh, ow) in pyramid_configuration:
        hs, he = _adaptive_windows(H, oh)
        ws, we = _adaptive_windows(W, ow)
        pooled = jnp.stack(
            [
                jnp.stack(
                    [
                        jnp.max(x[:, :, hs[i]:he[i], ws[j]:we[j]], axis=(2, 3))
                        for j in range(ow)
                    ],
                    axis=-1,
                )
                for i in range(oh)
            ],
            axis=2,
        )  # (B, C, oh, ow)
        outs.append(pooled.reshape(B, -1))
    return jnp.concatenate(outs, axis=1)


if __name__ == "__main__":
    key = jax.random.PRNGKey(0)
    k1, k2 = jax.random.split(key)

    # Test 1: canonical pyramid, evenly divisible windows, small channel count.
    B, C, H, W = 2, 8, 16, 16
    x = jax.random.normal(k1, (B, C, H, W), dtype=jnp.float32)
    pc = [(4, 4), (2, 2), (1, 1)]
    spp = SPP(pc)
    out = jax.block_until_ready(spp(x))
    assert out.shape == (B, C * spp.output_size), out.shape
    ref = _reference_spp(x, pc)
    assert jnp.allclose(out, ref, atol=1e-6, rtol=1e-6)

    # Test 2: uneven adaptive windows (H=15), a non-nested level, full-C blocks.
    B2, C2, H2, W2 = 2, 256, 15, 16
    x2 = jax.random.normal(k2, (B2, C2, H2, W2), dtype=jnp.float32)
    pc2 = [(4, 4), (2, 2), (3, 2)]
    spp2 = SPP(pc2)
    out2 = jax.block_until_ready(spp2(x2))
    assert out2.shape == (B2, C2 * spp2.output_size), out2.shape
    ref2 = _reference_spp(x2, pc2)
    assert jnp.allclose(out2, ref2, atol=1e-6, rtol=1e-6)

    print("KERNEL_OK")
</pallas_src>

<mosaic_0001>
module attributes {stable_mosaic.version = 11 : i64} {
  func.func @kernel(%arg0: i32, %arg1: i32, %arg2: memref<1x8x256xf32, #tpu.memory_space<vmem>>, %arg3: memref<1x8x16xf32, #tpu.memory_space<vmem>>, %arg4: memref<1x8x4xf32, #tpu.memory_space<vmem>>, %arg5: memref<1x8x1xf32, #tpu.memory_space<vmem>>) attributes {dimension_semantics = [#tpu.dimension_semantics<parallel>, #tpu.dimension_semantics<parallel>], iteration_bounds = array<i64: 2, 1>, scalar_prefetch = 0 : i64, scratch_operands = 0 : i64, tpu.core_type = #tpu.core_type<tc>, window_params = [{transform_indices = @transform_0, window_bounds = array<i64: 1, 8, 256>}, {transform_indices = @transform_1, window_bounds = array<i64: 1, 8, 16>}, {transform_indices = @transform_2, window_bounds = array<i64: 1, 8, 4>}, {transform_indices = @transform_3, window_bounds = array<i64: 1, 8, 1>}]} {
    %c0 = arith.constant 0 : index
    %c0_0 = arith.constant 0 : index
    %c0_1 = arith.constant 0 : index
    %0 = vector.load %arg2[%c0, %c0_0, %c0_1] : memref<1x8x256xf32, #tpu.memory_space<vmem>>, vector<1x8x256xf32>
    %1 = vector.shape_cast %0 : vector<1x8x256xf32> to vector<8x256xf32>
    %2 = tpu.transpose %1, [1, 0] : vector<8x256xf32> -> vector<256x8xf32>
    %3 = vector.extract_strided_slice %2 {offsets = [0, 0], sizes = [16, 8], strides = [1, 1]} : vector<256x8xf32> to vector<16x8xf32>
    %4 = vector.extract_strided_slice %2 {offsets = [16, 0], sizes = [16, 8], strides = [1, 1]} : vector<256x8xf32> to vector<16x8xf32>
    %5 = arith.maximumf %3, %4 : vector<16x8xf32>
    %6 = vector.extract_strided_slice %2 {offsets = [32, 0], sizes = [16, 8], strides = [1, 1]} : vector<256x8xf32> to vector<16x8xf32>
    %7 = arith.maximumf %5, %6 : vector<16x8xf32>
    %8 = vector.extract_strided_slice %2 {offsets = [48, 0], sizes = [16, 8], strides = [1, 1]} : vector<256x8xf32> to vector<16x8xf32>
    %9 = arith.maximumf %7, %8 : vector<16x8xf32>
    %10 = vector.extract_strided_slice %9 {offsets = [0, 0], sizes = [4, 8], strides = [1, 1]} : vector<16x8xf32> to vector<4x8xf32>
    %cst = arith.constant dense<0xFF800000> : vector<8xf32>
    %11 = vector.multi_reduction <maximumf>, %10, %cst [0] : vector<4x8xf32> to vector<8xf32>
    %12 = vector.shape_cast %11 : vector<8xf32> to vector<1x8xf32>
    %13 = vector.extract_strided_slice %9 {offsets = [4, 0], sizes = [4, 8], strides = [1, 1]} : vector<16x8xf32> to vector<4x8xf32>
    %cst_2 = arith.constant dense<0xFF800000> : vector<8xf32>
    %14 = vector.multi_reduction <maximumf>, %13, %cst_2 [0] : vector<4x8xf32> to vector<8xf32>
    %15 = vector.shape_cast %14 : vector<8xf32> to vector<1x8xf32>
    %16 = vector.extract_strided_slice %9 {offsets = [8, 0], sizes = [4, 8], strides = [1, 1]} : vector<16x8xf32> to vector<4x8xf32>
    %cst_3 = arith.constant dense<0xFF800000> : vector<8xf32>
    %17 = vector.multi_reduction <maximumf>, %16, %cst_3 [0] : vector<4x8xf32> to vector<8xf32>
    %18 = vector.shape_cast %17 : vector<8xf32> to vector<1x8xf32>
    %19 = vector.extract_strided_slice %9 {offsets = [12, 0], sizes = [4, 8], strides = [1, 1]} : vector<16x8xf32> to vector<4x8xf32>
    %cst_4 = arith.constant dense<0xFF800000> : vector<8xf32>
    %20 = vector.multi_reduction <maximumf>, %19, %cst_4 [0] : vector<4x8xf32> to vector<8xf32>
    %21 = vector.shape_cast %20 : vector<8xf32> to vector<1x8xf32>
    %22 = vector.extract_strided_slice %2 {offsets = [64, 0], sizes = [16, 8], strides = [1, 1]} : vector<256x8xf32> to vector<16x8xf32>
    %23 = vector.extract_strided_slice %2 {offsets = [80, 0], sizes = [16, 8], strides = [1, 1]} : vector<256x8xf32> to vector<16x8xf32>
    %24 = arith.maximumf %22, %23 : vector<16x8xf32>
    %25 = vector.extract_strided_slice %2 {offsets = [96, 0], sizes = [16, 8], strides = [1, 1]} : vector<256x8xf32> to vector<16x8xf32>
    %26 = arith.maximumf %24, %25 : vector<16x8xf32>
    %27 = vector.extract_strided_slice %2 {offsets = [112, 0], sizes = [16, 8], strides = [1, 1]} : vector<256x8xf32> to vector<16x8xf32>
    %28 = arith.maximumf %26, %27 : vector<16x8xf32>
    %29 = vector.extract_strided_slice %28 {offsets = [0, 0], sizes = [4, 8], strides = [1, 1]} : vector<16x8xf32> to vector<4x8xf32>
    %cst_5 = arith.constant dense<0xFF800000> : vector<8xf32>
    %30 = vector.multi_reduction <maximumf>, %29, %cst_5 [0] : vector<4x8xf32> to vector<8xf32>
    %31 = vector.shape_cast %30 : vector<8xf32> to vector<1x8xf32>
    %32 = vector.extract_strided_slice %28 {offsets = [4, 0], sizes = [4, 8], strides = [1, 1]} : vector<16x8xf32> to vector<4x8xf32>
    %cst_6 = arith.constant dense<0xFF800000> : vector<8xf32>
    %33 = vector.multi_reduction <maximumf>, %32, %cst_6 [0] : vector<4x8xf32> to vector<8xf32>
    %34 = vector.shape_cast %33 : vector<8xf32> to vector<1x8xf32>
    %35 = vector.extract_strided_slice %28 {offsets = [8, 0], sizes = [4, 8], strides = [1, 1]} : vector<16x8xf32> to vector<4x8xf32>
    %cst_7 = arith.constant dense<0xFF800000> : vector<8xf32>
    %36 = vector.multi_reduction <maximumf>, %35, %cst_7 [0] : vector<4x8xf32> to vector<8xf32>
    %37 = vector.shape_cast %36 : vector<8xf32> to vector<1x8xf32>
    %38 = vector.extract_strided_slice %28 {offsets = [12, 0], sizes = [4, 8], strides = [1, 1]} : vector<16x8xf32> to vector<4x8xf32>
    %cst_8 = arith.constant dense<0xFF800000> : vector<8xf32>
    %39 = vector.multi_reduction <maximumf>, %38, %cst_8 [0] : vector<4x8xf32> to vector<8xf32>
    %40 = vector.shape_cast %39 : vector<8xf32> to vector<1x8xf32>
    %41 = vector.extract_strided_slice %2 {offsets = [128, 0], sizes = [16, 8], strides = [1, 1]} : vector<256x8xf32> to vector<16x8xf32>
    %42 = vector.extract_strided_slice %2 {offsets = [144, 0], sizes = [16, 8], strides = [1, 1]} : vector<256x8xf32> to vector<16x8xf32>
    %43 = arith.maximumf %41, %42 : vector<16x8xf32>
    %44 = vector.extract_strided_slice %2 {offsets = [160, 0], sizes = [16, 8], strides = [1, 1]} : vector<256x8xf32> to vector<16x8xf32>
    %45 = arith.maximumf %43, %44 : vector<16x8xf32>
    %46 = vector.extract_strided_slice %2 {offsets = [176, 0], sizes = [16, 8], strides = [1, 1]} : vector<256x8xf32> to vector<16x8xf32>
    %47 = arith.maximumf %45, %46 : vector<16x8xf32>
    %48 = vector.extract_strided_slice %47 {offsets = [0, 0], sizes = [4, 8], strides = [1, 1]} : vector<16x8xf32> to vector<4x8xf32>
    %cst_9 = arith.constant dense<0xFF800000> : vector<8xf32>
    %49 = vector.multi_reduction <maximumf>, %48, %cst_9 [0] : vector<4x8xf32> to vector<8xf32>
    %50 = vector.shape_cast %49 : vector<8xf32> to vector<1x8xf32>
    %51 = vector.extract_strided_slice %47 {offsets = [4, 0], sizes = [4, 8], strides = [1, 1]} : vector<16x8xf32> to vector<4x8xf32>
    %cst_10 = arith.constant dense<0xFF800000> : vector<8xf32>
    %52 = vector.multi_reduction <maximumf>, %51, %cst_10 [0] : vector<4x8xf32> to vector<8xf32>
    %53 = vector.shape_cast %52 : vector<8xf32> to vector<1x8xf32>
    %54 = vector.extract_strided_slice %47 {offsets = [8, 0], sizes = [4, 8], strides = [1, 1]} : vector<16x8xf32> to vector<4x8xf32>
    %cst_11 = arith.constant dense<0xFF800000> : vector<8xf32>
    %55 = vector.multi_reduction <maximumf>, %54, %cst_11 [0] : vector<4x8xf32> to vector<8xf32>
    %56 = vector.shape_cast %55 : vector<8xf32> to vector<1x8xf32>
    %57 = vector.extract_strided_slice %47 {offsets = [12, 0], sizes = [4, 8], strides = [1, 1]} : vector<16x8xf32> to vector<4x8xf32>
    %cst_12 = arith.constant dense<0xFF800000> : vector<8xf32>
    %58 = vector.multi_reduction <maximumf>, %57, %cst_12 [0] : vector<4x8xf32> to vector<8xf32>
    %59 = vector.shape_cast %58 : vector<8xf32> to vector<1x8xf32>
    %60 = vector.extract_strided_slice %2 {offsets = [192, 0], sizes = [16, 8], strides = [1, 1]} : vector<256x8xf32> to vector<16x8xf32>
    %61 = vector.extract_strided_slice %2 {offsets = [208, 0], sizes = [16, 8], strides = [1, 1]} : vector<256x8xf32> to vector<16x8xf32>
    %62 = arith.maximumf %60, %61 : vector<16x8xf32>
    %63 = vector.extract_strided_slice %2 {offsets = [224, 0], sizes = [16, 8], strides = [1, 1]} : vector<256x8xf32> to vector<16x8xf32>
    %64 = arith.maximumf %62, %63 : vector<16x8xf32>
    %65 = vector.extract_strided_slice %2 {offsets = [240, 0], sizes = [16, 8], strides = [1, 1]} : vector<256x8xf32> to vector<16x8xf32>
    %66 = arith.maximumf %64, %65 : vector<16x8xf32>
    %67 = vector.extract_strided_slice %66 {offsets = [0, 0], sizes = [4, 8], strides = [1, 1]} : vector<16x8xf32> to vector<4x8xf32>
    %cst_13 = arith.constant dense<0xFF800000> : vector<8xf32>
    %68 = vector.multi_reduction <maximumf>, %67, %cst_13 [0] : vector<4x8xf32> to vector<8xf32>
    %69 = vector.shape_cast %68 : vector<8xf32> to vector<1x8xf32>
    %70 = vector.extract_strided_slice %66 {offsets = [4, 0], sizes = [4, 8], strides = [1, 1]} : vector<16x8xf32> to vector<4x8xf32>
    %cst_14 = arith.constant dense<0xFF800000> : vector<8xf32>
    %71 = vector.multi_reduction <maximumf>, %70, %cst_14 [0] : vector<4x8xf32> to vector<8xf32>
    %72 = vector.shape_cast %71 : vector<8xf32> to vector<1x8xf32>
    %73 = vector.extract_strided_slice %66 {offsets = [8, 0], sizes = [4, 8], strides = [1, 1]} : vector<16x8xf32> to vector<4x8xf32>
    %cst_15 = arith.constant dense<0xFF800000> : vector<8xf32>
    %74 = vector.multi_reduction <maximumf>, %73, %cst_15 [0] : vector<4x8xf32> to vector<8xf32>
    %75 = vector.shape_cast %74 : vector<8xf32> to vector<1x8xf32>
    %76 = vector.extract_strided_slice %66 {offsets = [12, 0], sizes = [4, 8], strides = [1, 1]} : vector<16x8xf32> to vector<4x8xf32>
    %cst_16 = arith.constant dense<0xFF800000> : vector<8xf32>
    %77 = vector.multi_reduction <maximumf>, %76, %cst_16 [0] : vector<4x8xf32> to vector<8xf32>
    %78 = vector.shape_cast %77 : vector<8xf32> to vector<1x8xf32>
    %79 = tpu.concatenate %12, %15, %18, %21, %31, %34, %37, %40, %50, %53, %56, %59, %69, %72, %75, %78 in 0 : vector<1x8xf32>, vector<1x8xf32>, vector<1x8xf32>, vector<1x8xf32>, vector<1x8xf32>, vector<1x8xf32>, vector<1x8xf32>, vector<1x8xf32>, vector<1x8xf32>, vector<1x8xf32>, vector<1x8xf32>, vector<1x8xf32>, vector<1x8xf32>, vector<1x8xf32>, vector<1x8xf32>, vector<1x8xf32> -> vector<16x8xf32>
    %80 = tpu.transpose %79, [1, 0] : vector<16x8xf32> -> vector<8x16xf32>
    %81 = vector.shape_cast %80 : vector<8x16xf32> to vector<1x8x16xf32>
    %c0_17 = arith.constant 0 : index
    %c0_18 = arith.constant 0 : index
    %c0_19 = arith.constant 0 : index
    %82 = vector.load %arg3[%c0_17, %c0_18, %c0_19] : memref<1x8x16xf32, #tpu.memory_space<vmem>>, vector<1x8x16xf32>
    tpu.vector_store %arg3[%c0_17, %c0_18, %c0_19], %81 {strides = array<i32>} : memref<1x8x16xf32, #tpu.memory_space<vmem>>, vector<1x8x16xf32>,
    %83 = vector.extract_strided_slice %79 {offsets = [0, 0], sizes = [1, 8], strides = [1, 1]} : vector<16x8xf32> to vector<1x8xf32>
    %84 = vector.extract_strided_slice %79 {offsets = [1, 0], sizes = [1, 8], strides = [1, 1]} : vector<16x8xf32> to vector<1x8xf32>
    %85 = arith.maximumf %83, %84 : vector<1x8xf32>
    %86 = vector.extract_strided_slice %79 {offsets = [4, 0], sizes = [1, 8], strides = [1, 1]} : vector<16x8xf32> to vector<1x8xf32>
    %87 = arith.maximumf %85, %86 : vector<1x8xf32>
    %88 = vector.extract_strided_slice %79 {offsets = [5, 0], sizes = [1, 8], strides = [1, 1]} : vector<16x8xf32> to vector<1x8xf32>
    %89 = arith.maximumf %87, %88 : vector<1x8xf32>
    %90 = vector.extract_strided_slice %79 {offsets = [2, 0], sizes = [1, 8], strides = [1, 1]} : vector<16x8xf32> to vector<1x8xf32>
    %91 = vector.extract_strided_slice %79 {offsets = [3, 0], sizes = [1, 8], strides = [1, 1]} : vector<16x8xf32> to vector<1x8xf32>
    %92 = arith.maximumf %90, %91 : vector<1x8xf32>
    %93 = vector.extract_strided_slice %79 {offsets = [6, 0], sizes = [1, 8], strides = [1, 1]} : vector<16x8xf32> to vector<1x8xf32>
    %94 = arith.maximumf %92, %93 : vector<1x8xf32>
    %95 = vector.extract_strided_slice %79 {offsets = [7, 0], sizes = [1, 8], strides = [1, 1]} : vector<16x8xf32> to vector<1x8xf32>
    %96 = arith.maximumf %94, %95 : vector<1x8xf32>
    %97 = vector.extract_strided_slice %79 {offsets = [8, 0], sizes = [1, 8], strides = [1, 1]} : vector<16x8xf32> to vector<1x8xf32>
    %98 = vector.extract_strided_slice %79 {offsets = [9, 0], sizes = [1, 8], strides = [1, 1]} : vector<16x8xf32> to vector<1x8xf32>
    %99 = arith.maximumf %97, %98 : vector<1x8xf32>
    %100 = vector.extract_strided_slice %79 {offsets = [12, 0], sizes = [1, 8], strides = [1, 1]} : vector<16x8xf32> to vector<1x8xf32>
    %101 = arith.maximumf %99, %100 : vector<1x8xf32>
    %102 = vector.extract_strided_slice %79 {offsets = [13, 0], sizes = [1, 8], strides = [1, 1]} : vector<16x8xf32> to vector<1x8xf32>
    %103 = arith.maximumf %101, %102 : vector<1x8xf32>
    %104 = vector.extract_strided_slice %79 {offsets = [10, 0], sizes = [1, 8], strides = [1, 1]} : vector<16x8xf32> to vector<1x8xf32>
    %105 = vector.extract_strided_slice %79 {offsets = [11, 0], sizes = [1, 8], strides = [1, 1]} : vector<16x8xf32> to vector<1x8xf32>
    %106 = arith.maximumf %104, %105 : vector<1x8xf32>
    %107 = vector.extract_strided_slice %79 {offsets = [14, 0], sizes = [1, 8], strides = [1, 1]} : vector<16x8xf32> to vector<1x8xf32>
    %108 = arith.maximumf %106, %107 : vector<1x8xf32>
    %109 = vector.extract_strided_slice %79 {offsets = [15, 0], sizes = [1, 8], strides = [1, 1]} : vector<16x8xf32> to vector<1x8xf32>
    %110 = arith.maximumf %108, %109 : vector<1x8xf32>
    %111 = tpu.concatenate %89, %96, %103, %110 in 0 : vector<1x8xf32>, vector<1x8xf32>, vector<1x8xf32>, vector<1x8xf32> -> vector<4x8xf32>
    %112 = tpu.transpose %111, [1, 0] : vector<4x8xf32> -> vector<8x4xf32>
    %113 = vector.shape_cast %112 : vector<8x4xf32> to vector<1x8x4xf32>
    %c0_20 = arith.constant 0 : index
    %c0_21 = arith.constant 0 : index
    %c0_22 = arith.constant 0 : index
    %114 = vector.load %arg4[%c0_20, %c0_21, %c0_22] : memref<1x8x4xf32, #tpu.memory_space<vmem>>, vector<1x8x4xf32>
    tpu.vector_store %arg4[%c0_20, %c0_21, %c0_22], %113 {strides = array<i32>} : memref<1x8x4xf32, #tpu.memory_space<vmem>>, vector<1x8x4xf32>,
    %115 = vector.extract_strided_slice %111 {offsets = [0, 0], sizes = [1, 8], strides = [1, 1]} : vector<4x8xf32> to vector<1x8xf32>
    %116 = vector.extract_strided_slice %111 {offsets = [1, 0], sizes = [1, 8], strides = [1, 1]} : vector<4x8xf32> to vector<1x8xf32>
    %117 = arith.maximumf %115, %116 : vector<1x8xf32>
    %118 = vector.extract_strided_slice %111 {offsets = [2, 0], sizes = [1, 8], strides = [1, 1]} : vector<4x8xf32> to vector<1x8xf32>
    %119 = arith.maximumf %117, %118 : vector<1x8xf32>
    %120 = vector.extract_strided_slice %111 {offsets = [3, 0], sizes = [1, 8], strides = [1, 1]} : vector<4x8xf32> to vector<1x8xf32>
    %121 = arith.maximumf %119, %120 : vector<1x8xf32>
    %122 = tpu.transpose %121, [1, 0] : vector<1x8xf32> -> vector<8x1xf32>
    %123 = vector.shape_cast %122 : vector<8x1xf32> to vector<1x8x1xf32>
    %c0_23 = arith.constant 0 : index
    %c0_24 = arith.constant 0 : index
    %c0_25 = arith.constant 0 : index
    %124 = vector.load %arg5[%c0_23, %c0_24, %c0_25] : memref<1x8x1xf32, #tpu.memory_space<vmem>>, vector<1x8x1xf32>
    tpu.vector_store %arg5[%c0_23, %c0_24, %c0_25], %123 {strides = array<i32>} : memref<1x8x1xf32, #tpu.memory_space<vmem>>, vector<1x8x1xf32>,
    return
  }
  func.func @transform_0(%arg0: i32, %arg1: i32) -> (i32, i32, i32) {
    %c0_i32 = arith.constant 0 : i32
    %c0_i32_0 = arith.constant 0 : i32
    return %arg0, %arg1, %c0_i32 : i32, i32, i32
  }
  func.func @transform_1(%arg0: i32, %arg1: i32) -> (i32, i32, i32) {
    %c0_i32 = arith.constant 0 : i32
    %c0_i32_0 = arith.constant 0 : i32
    return %arg0, %arg1, %c0_i32 : i32, i32, i32
  }
  func.func @transform_2(%arg0: i32, %arg1: i32) -> (i32, i32, i32) {
    %c0_i32 = arith.constant 0 : i32
    %c0_i32_0 = arith.constant 0 : i32
    return %arg0, %arg1, %c0_i32 : i32, i32, i32
  }
  func.func @transform_3(%arg0: i32, %arg1: i32) -> (i32, i32, i32) {
    %c0_i32 = arith.constant 0 : i32
    %c0_i32_0 = arith.constant 0 : i32
    return %arg0, %arg1, %c0_i32 : i32, i32, i32
  }
}

</mosaic_0001>

<llo_original>
// kernel: tpu_custom_call.1
$region0: #{tpu_custom_call.1}
  #allocation0 [shape = 'u32[]', space=smem, size = 0x4, offset = 0x4, fixed_abs, tag = 'smem constant byte address 0x4 - core index']
  #allocation1 [shape = 'u32[144,128]{1,0:T(1,128)}', space=vmem, size = 0x12000, scoped, tag = 'internal scratch']
  %s0 = inlined_call_operand.hbm [shape: f32[2,8,256], index: 0, kind: input, shape index: {}]
  %s1 = inlined_call_operand.hbm [shape: f32[2,8,16], index: 1, kind: output, shape index: {0}]
  %s2 = inlined_call_operand.vmem [shape: f32[2,8,4], index: 2, kind: output, shape index: {1}]
  %s3 = inlined_call_operand.vmem [shape: f32[2,8,1], index: 3, kind: output, shape index: {2}]
  %4 = xla_tuple %s1, %s2, %s3
  %s5 = sld [smem:[#allocation0]]
  $region57: #{tpu_custom_call.1} parent=0
    _
  %s7 = ssub.s32 1, %s5
  %s8 = scalar_select 0, %s7, %s5
  $region1: #{tpu_custom_call.1} parent=0
    #allocation2 [shape = 'u8[16384]{0}', space=vmem, size = 0x4000, scoped, tag = 'input window, operand 0']
    #allocation3 [shape = 's32[2]{0}', space=sflag, size = 0x8, scoped, tag = 'scoped memory for tpu_custom_call.1']
    #allocation4 [shape = 's32[2]{0}', space=sflag, size = 0x8, scoped, tag = 'scoped memory for tpu_custom_call.1']
    #allocation5 [shape = 'u8[8192]{0}', space=vmem, size = 0x2000, scoped, tag = 'output window, operand 0']
    %9 = vsyncpa [#allocation3], 0
    %s10 = scalar_lea.sflag [#allocation3], 1
    %11 = vsyncpa %s10, 0
    %12 = vsyncpa [#allocation4], 0
    %s13 = scalar_lea.sflag [#allocation4], 1
    %14 = vsyncpa %s13, 0
    loop: start=0, step=1, limit=4
    $region2: #{tpu_custom_call.1} parent=1 // loop_pre_header
      _
    $region3: #{tpu_custom_call.1} parent=1 // loop_header
      %s16 = sphi 0, %s20
      %p17 = scmp.ge.s32.totalorder %s16, 4
      %s23 = sphi 0, %s35
      %s24 = sphi 0, %s31
      %s25 = sphi 0, %s23
      %s26 = sphi 0, %s24
      %s27 = sphi 0, %s25
      %s28 = sphi 0, %s26
      %s40 = sphi 0, %s42
      %s43 = sphi 0, %s40
      %s44 = sphi 0, %s43
      %s60 = sphi 0, %s44
      %s68 = sphi 0, %s70
      %s71 = sphi 0, %s68
      %s72 = sphi 0, %s71
      %s88 = sphi 0, %s72
      %s96 = sphi 0, %s98
      %s99 = sphi 0, %s96
      %s100 = sphi 0, %s99
      %s116 = sphi 0, %s100
      %s124 = sphi 0, %s126
      %s127 = sphi 0, %s124
      %s128 = sphi 0, %s127
      %s144 = sphi 0, %s128
    $region4: #{tpu_custom_call.1} parent=1 // loop_header_branch
      %19 = sbr.rel (%p17) target = $region8
    $region5: #{tpu_custom_call.1} parent=1 // loop_body
      %s21 = ssub.s32 %s16, 1
      %s22 = ssub.s32 %s16, 2
      %s29 = sadd.s32 1, %s24
      %p30 = scmp.ge.s32.totalorder %s29, 1
      %s31 = scalar_select %p30, 0, %s29
      %s32 = sadd.s32 1, %s23
      %s33 = scalar_select %p30, %s32, %s23
      %p34 = scmp.ge.s32.totalorder %s33, 2
      %s35 = scalar_select %p34, 0, %s33
      %s36 = ssub.s32 %s23, %s35
      %s37 = ssub.s32 %s24, %s31
      %s38 = sor.u32 %s36, %s37
      %p39 = scmp.eq.s32.totalorder %s38, 0
      %s41 = sadd.s32 %s40, 1
      %s42 = scalar_select %p39, %s40, %s41
      %p45 = pneg %p39
      %p46 = scmp.eq.s32.totalorder %s16, 1
      %p47 = por %p45, %p46
      %p48 = scmp.ne.s32.totalorder %s40, %s43
      %p49 = scmp.eq.s32.totalorder %s16, 0
      %p50 = por %p48, %p49
      %p51 = scmp.ne.s32.totalorder %s40, %s43
      %p52 = scmp.eq.s32.totalorder %s21, 1
      %p53 = por %p51, %p52
      %p54 = scmp.ne.s32.totalorder %s43, %s44
      %p55 = scmp.eq.s32.totalorder %s21, 0
      %p56 = por %p54, %p55
      %p57 = scmp.ne.s32.totalorder %s43, %s44
      %p58 = scmp.eq.s32.totalorder %s22, 1
      %p59 = por %p57, %p58
      %p61 = scmp.ne.s32.totalorder %s44, %s60
      %p62 = scmp.eq.s32.totalorder %s22, 0
      %p63 = por %p61, %p62
      %s64 = ssub.s32 %s23, %s35
      %s65 = ssub.s32 %s24, %s31
      %s66 = sor.u32 %s64, %s65
      %p67 = scmp.eq.s32.totalorder %s66, 0
      %s69 = sadd.s32 %s68, 1
      %s70 = scalar_select %p67, %s68, %s69
      %p73 = pneg %p67
      %p74 = scmp.eq.s32.totalorder %s16, 1
      %p75 = por %p73, %p74
      %p76 = scmp.ne.s32.totalorder %s68, %s71
      %p77 = scmp.eq.s32.totalorder %s16, 0
      %p78 = por %p76, %p77
      %p79 = scmp.ne.s32.totalorder %s68, %s71
      %p80 = scmp.eq.s32.totalorder %s21, 1
      %p81 = por %p79, %p80
      %p82 = scmp.ne.s32.totalorder %s71, %s72
      %p83 = scmp.eq.s32.totalorder %s21, 0
      %p84 = por %p82, %p83
      %p85 = scmp.ne.s32.totalorder %s71, %s72
      %p86 = scmp.eq.s32.totalorder %s22, 1
      %p87 = por %p85, %p86
      %p89 = scmp.ne.s32.totalorder %s72, %s88
      %p90 = scmp.eq.s32.totalorder %s22, 0
      %p91 = por %p89, %p90
      %s92 = ssub.s32 %s23, %s35
      %s93 = ssub.s32 %s24, %s31
      %s94 = sor.u32 %s92, %s93
      %p95 = scmp.eq.s32.totalorder %s94, 0
      %s97 = sadd.s32 %s96, 1
      %s98 = scalar_select %p95, %s96, %s97
      %p101 = pneg %p95
      %p102 = scmp.eq.s32.totalorder %s16, 1
      %p103 = por %p101, %p102
      %p104 = scmp.ne.s32.totalorder %s96, %s99
      %p105 = scmp.eq.s32.totalorder %s16, 0
      %p106 = por %p104, %p105
      %p107 = scmp.ne.s32.totalorder %s96, %s99
      %p108 = scmp.eq.s32.totalorder %s21, 1
      %p109 = por %p107, %p108
      %p110 = scmp.ne.s32.totalorder %s99, %s100
      %p111 = scmp.eq.s32.totalorder %s21, 0
      %p112 = por %p110, %p111
      %p113 = scmp.ne.s32.totalorder %s99, %s100
      %p114 = scmp.eq.s32.totalorder %s22, 1
      %p115 = por %p113, %p114
      %p117 = scmp.ne.s32.totalorder %s100, %s116
      %p118 = scmp.eq.s32.totalorder %s22, 0
      %p119 = por %p117, %p118
      %s120 = ssub.s32 %s23, %s35
      %s121 = ssub.s32 %s24, %s31
      %s122 = sor.u32 %s120, %s121
      %p123 = scmp.eq.s32.totalorder %s122, 0
      %s125 = sadd.s32 %s124, 1
      %s126 = scalar_select %p123, %s124, %s125
      %p129 = pneg %p123
      %p130 = scmp.eq.s32.totalorder %s16, 1
      %p131 = por %p129, %p130
      %p132 = scmp.ne.s32.totalorder %s124, %s127
      %p133 = scmp.eq.s32.totalorder %s16, 0
      %p134 = por %p132, %p133
      %p135 = scmp.ne.s32.totalorder %s124, %s127
      %p136 = scmp.eq.s32.totalorder %s21, 1
      %p137 = por %p135, %p136
      %p138 = scmp.ne.s32.totalorder %s127, %s128
      %p139 = scmp.eq.s32.totalorder %s21, 0
      %p140 = por %p138, %p139
      %p141 = scmp.ne.s32.totalorder %s127, %s128
      %p142 = scmp.eq.s32.totalorder %s22, 1
      %p143 = por %p141, %p142
      %p145 = scmp.ne.s32.totalorder %s128, %s144
      %p146 = scmp.eq.s32.totalorder %s22, 0
      %p147 = por %p145, %p146
      %p148 = scmp.le.s32.totalorder 1, %s16
      %p149 = scmp.lt.s32.totalorder %s16, 3
      %p150 = pnand %p148, %p149
      %p151 = pneg %p150
      // Predicated region
      $region9: #{tpu_custom_call.1} parent=5 // pred_check
        _
      $region10: #{tpu_custom_call.1} parent=5 // pred_check_branch
        %153 = sbr.rel (%p150) target = $region12
      $region11: #{tpu_custom_call.1} parent=5 // pred_region
        %s154 = ssub.s32 %s16, 1
      $region12: #{tpu_custom_call.1} parent=5 // pred_fallthru
        _
      %p155 = scmp.lt.s32.totalorder %s16, 2
      // Predicated region
      $region13: #{tpu_custom_call.1} parent=5 // pred_check
        %p156 = pneg %p155
      $region14: #{tpu_custom_call.1} parent=5 // pred_check_branch
        %158 = sbr.rel (%p156) target = $region16
      $region15: #{tpu_custom_call.1} parent=5 // pred_region
        // Predicated region
        $region17: #{tpu_custom_call.1} parent=15 // pred_check
          %p159 = pneg %p50
        $region18: #{tpu_custom_call.1} parent=15 // pred_check_branch
          %161 = sbr.rel (%p159) target = $region20
        $region19: #{tpu_custom_call.1} parent=15 // pred_region
          %s162 = sand.u32 %s40, 1
          %s163 = scalar_lea.sflag [#allocation3], %s162
          %s164 = sand.u32 %s40, 1
          %s165 = smul.addr %s164, 16
          %s166 = scalar_lea.vmem [#allocation2], %s165
          %s168 = ssub.s32 256, 256
          %169 = vsyncadd %s163, %s168
          %s170 = smul.addr %s24, 2
          %s171 = smul.addr %s23, 2
          %s172 = sadd.s32 %s170, %s171
          %s173 = smul.addr %s172, 128
          %s174 = scalar_lea.hbm %s0, %s173
          %s176 = sshll.u32 %s166, 4
          %s177 = int_to_ptr.vmem [resolvable:$true] %s176
          %179 = dma.hbm_to_vmem [thread:$0]  %s174, 256, %s177, %s163
        $region20: #{tpu_custom_call.1} parent=15 // pred_fallthru
          _
      $region16: #{tpu_custom_call.1} parent=5 // pred_fallthru
        _
      %p180 = scmp.le.s32.totalorder 1, %s16
      %p181 = scmp.lt.s32.totalorder %s16, 3
      %p182 = pnand %p180, %p181
      %p183 = pneg %p182
      // Predicated region
      $region21: #{tpu_custom_call.1} parent=5 // pred_check
        _
      $region22: #{tpu_custom_call.1} parent=5 // pred_check_branch
        %185 = sbr.rel (%p182) target = $region24
      $region23: #{tpu_custom_call.1} parent=5 // pred_region
        %s186 = ssub.s32 %s16, 1
        %s187 = sand.u32 %s43, 1
        %s188 = scalar_lea.sflag [#allocation3], %s187
        %s189 = sand.u32 %s43, 1
        %s190 = smul.addr %s189, 16
        %s191 = scalar_lea.vmem [#allocation2], %s190
        // Predicated region
        $region25: #{tpu_custom_call.1} parent=23 // pred_check
          %p192 = pneg %p56
        $region26: #{tpu_custom_call.1} parent=23 // pred_check_branch
          %194 = sbr.rel (%p192) target = $region28
        $region27: #{tpu_custom_call.1} parent=23 // pred_region
          %195 = dma.done %s188, 256
        $region28: #{tpu_custom_call.1} parent=23 // pred_fallthru
          _
        %s196 = sand.u32 %s43, 1
        %s197 = scalar_lea.sflag [#allocation3], %s196
        %s198 = sand.u32 %s43, 1
        %s199 = smul.addr %s198, 16
        %s200 = scalar_lea.vmem [#allocation2], %s199
        %p201 = pneg %p56
        %p202 = pneg %p53
        %p203 = pneg %p84
        %p204 = pneg %p81
        %s205 = sand.u32 %s71, 1
        %s206 = scalar_lea.sflag [#allocation4], %s205
        %s207 = sand.u32 %s71, 1
        %s208 = smul.addr %s207, 8
        %s209 = scalar_lea.vmem [#allocation5], %s208
        %p210 = pneg %p112
        %p211 = pneg %p109
        %p212 = scmp.lt.s32.totalorder %s25, 1
        %s213 = scalar_select %p212, %s25, 1
        %p214 = scmp.lt.s32.totalorder %s26, 0
        %s215 = scalar_select %p214, %s26, 0
        %s216 = sadd.s32 %s215, %s213
        %s217 = smul.addr %s216, 8
        %s218 = scalar_lea.vmem %s2, %s217
        %p219 = pneg %p140
        %p220 = pneg %p137
        %p221 = scmp.lt.s32.totalorder %s25, 1
        %s222 = scalar_select %p221, %s25, 1
        %p223 = scmp.lt.s32.totalorder %s26, 0
        %s224 = scalar_select %p223, %s26, 0
        %s225 = sadd.s32 %s224, %s222
        %s226 = smul.addr %s225, 8
        %s227 = scalar_lea.vmem %s3, %s226
        %p228 = scmp.lt.s32.totalorder %s25, 1
        %s229 = scalar_select %p228, %s25, 1
        %p230 = scmp.lt.s32.totalorder %s26, 0
        %s231 = scalar_select %p230, %s26, 0
        %s232 = sadd.s32 %s231, %s229
        %s233 = smul.addr %s232, 8
        %s234 = scalar_lea.vmem %s2, %s233
        %p235 = scmp.lt.s32.totalorder %s25, 1
        %s236 = scalar_select %p235, %s25, 1
        %p237 = scmp.lt.s32.totalorder %s26, 0
        %s238 = scalar_select %p237, %s26, 0
        %s239 = sadd.s32 %s238, %s236
        %s240 = smul.addr %s239, 8
        %s241 = scalar_lea.vmem %s3, %s240
        %v242 = vld [vmem:[%s191] sm:$0xff]
        %v243 = vld [vmem:[%s191 + $0x8] sm:$0xff]
        %244 = vxpose.xlu0.b32.start [1/16] %v242, 128
        %245 = vxpose.xlu0.b32.cont [2/16] 0.0, 128
        %246 = vxpose.xlu0.b32.cont [3/16] 0.0, 128
        %247 = vxpose.xlu0.b32.cont [4/16] 0.0, 128
        %248 = vxpose.xlu0.b32.cont [5/16] 0.0, 128
        %249 = vxpose.xlu0.b32.cont [6/16] 0.0, 128
        %250 = vxpose.xlu0.b32.cont [7/16] 0.0, 128
        %251 = vxpose.xlu0.b32.cont [8/16] 0.0, 128
        %252 = vxpose.xlu0.b32.cont [9/16] 0.0, 128
        %253 = vxpose.xlu0.b32.cont [10/16] 0.0, 128
        %254 = vxpose.xlu0.b32.cont [11/16] 0.0, 128
        %255 = vxpose.xlu0.b32.cont [12/16] 0.0, 128
        %256 = vxpose.xlu0.b32.cont [13/16] 0.0, 128
        %257 = vxpose.xlu0.b32.cont [14/16] 0.0, 128
        %258 = vxpose.xlu0.b32.cont [15/16] 0.0, 128
        %259 = vxpose.xlu0.b32.end [16/16] 0.0, 128
        %v260 = vpop.trf.xlu0
        %v261 = vpop.trf.xlu0
        %v262 = vpop.trf.xlu0
        %v263 = vpop.trf.xlu0
        %v264 = vpop.trf.xlu0
        %v265 = vpop.trf.xlu0
        %v266 = vpop.trf.xlu0
        %v267 = vpop.trf.xlu0
        %v268 = vpop.trf.xlu0
        %v269 = vpop.trf.xlu0
        %v270 = vpop.trf.xlu0
        %v271 = vpop.trf.xlu0
        %v272 = vpop.trf.xlu0
        %v273 = vpop.trf.xlu0
        %v274 = vpop.trf.xlu0
        %v275 = vpop.trf.xlu0
        %276 = vxpose.xlu0.b32.start [1/16] %v243, 128
        %277 = vxpose.xlu0.b32.cont [2/16] 0.0, 128
        %278 = vxpose.xlu0.b32.cont [3/16] 0.0, 128
        %279 = vxpose.xlu0.b32.cont [4/16] 0.0, 128
        %280 = vxpose.xlu0.b32.cont [5/16] 0.0, 128
        %281 = vxpose.xlu0.b32.cont [6/16] 0.0, 128
        %282 = vxpose.xlu0.b32.cont [7/16] 0.0, 128
        %283 = vxpose.xlu0.b32.cont [8/16] 0.0, 128
        %284 = vxpose.xlu0.b32.cont [9/16] 0.0, 128
        %285 = vxpose.xlu0.b32.cont [10/16] 0.0, 128
        %286 = vxpose.xlu0.b32.cont [11/16] 0.0, 128
        %287 = vxpose.xlu0.b32.cont [12/16] 0.0, 128
        %288 = vxpose.xlu0.b32.cont [13/16] 0.0, 128
        %289 = vxpose.xlu0.b32.cont [14/16] 0.0, 128
        %290 = vxpose.xlu0.b32.cont [15/16] 0.0, 128
        %291 = vxpose.xlu0.b32.end [16/16] 0.0, 128
        %v292 = vpop.trf.xlu0
        %v293 = vpop.trf.xlu0
        %v294 = vpop.trf.xlu0
        %v295 = vpop.trf.xlu0
        %v296 = vpop.trf.xlu0
        %v297 = vpop.trf.xlu0
        %v298 = vpop.trf.xlu0
        %v299 = vpop.trf.xlu0
        %v300 = vpop.trf.xlu0
        %v301 = vpop.trf.xlu0
        %v302 = vpop.trf.xlu0
        %v303 = vpop.trf.xlu0
        %v304 = vpop.trf.xlu0
        %v305 = vpop.trf.xlu0
        %v306 = vpop.trf.xlu0
        %v307 = vpop.trf.xlu0
        %v308 = vmax.f32 %v260, %v262
        %v309 = vmax.f32 %v261, %v263
        %v310 = vmax.f32 %v308, %v264
        %v311 = vmax.f32 %v309, %v265
        %v312 = vmax.f32 %v310, %v266
        %v313 = vmax.f32 %v311, %v267
        %vm314 = vcmask 60416
        %v315 = vsel %vm314, %v312, -inf
        %v316 = vrot.slane %v315, 4
        %v317 = vmax.f32 %v315, %v316
        %v318 = vrot.slane %v317, 2
        %v319 = vmax.f32 %v317, %v318
        %v320 = vrot.slane %v319, 1
        %v321 = vmax.f32 %v319, %v320
        %vm322 = vcmask 64516
        %v323 = vsel %vm322, %v312, -inf
        %v324 = vrot.slane %v323, 4
        %v325 = vmax.f32 %v323, %v324
        %v326 = vrot.slane %v325, 2
        %v327 = vmax.f32 %v325, %v326
        %v328 = vrot.slane %v327, 1
        %v329 = vmax.f32 %v327, %v328
        %v330 = vsel %vm314, %v313, -inf
        %v331 = vrot.slane %v330, 4
        %v332 = vmax.f32 %v330, %v331
        %v333 = vrot.slane %v332, 2
        %v334 = vmax.f32 %v332, %v333
        %v335 = vrot.slane %v334, 1
        %v336 = vmax.f32 %v334, %v335
        %v337 = vsel %vm322, %v313, -inf
        %v338 = vrot.slane %v337, 4
        %v339 = vmax.f32 %v337, %v338
        %v340 = vrot.slane %v339, 2
        %v341 = vmax.f32 %v339, %v340
        %v342 = vrot.slane %v341, 1
        %v343 = vmax.f32 %v341, %v342
        %v344 = vmax.f32 %v268, %v270
        %v345 = vmax.f32 %v269, %v271
        %v346 = vmax.f32 %v344, %v272
        %v347 = vmax.f32 %v345, %v273
        %v348 = vmax.f32 %v346, %v274
        %v349 = vmax.f32 %v347, %v275
        %v350 = vsel %vm314, %v348, -inf
        %v351 = vrot.slane %v350, 4
        %v352 = vmax.f32 %v350, %v351
        %v353 = vrot.slane %v352, 2
        %v354 = vmax.f32 %v352, %v353
        %v355 = vrot.slane %v354, 1
        %v356 = vmax.f32 %v354, %v355
        %v357 = vsel %vm322, %v348, -inf
        %v358 = vrot.slane %v357, 4
        %v359 = vmax.f32 %v357, %v358
        %v360 = vrot.slane %v359, 2
        %v361 = vmax.f32 %v359, %v360
        %v362 = vrot.slane %v361, 1
        %v363 = vmax.f32 %v361, %v362
        %v364 = vsel %vm314, %v349, -inf
        %v365 = vrot.slane %v364, 4
        %v366 = vmax.f32 %v364, %v365
        %v367 = vrot.slane %v366, 2
        %v368 = vmax.f32 %v366, %v367
        %v369 = vrot.slane %v368, 1
        %v370 = vmax.f32 %v368, %v369
        %v371 = vsel %vm322, %v349, -inf
        %v372 = vrot.slane %v371, 4
        %v373 = vmax.f32 %v371, %v372
        %v374 = vrot.slane %v373, 2
        %v375 = vmax.f32 %v373, %v374
        %v376 = vrot.slane %v375, 1
        %v377 = vmax.f32 %v375, %v376
        %v378 = vmax.f32 %v292, %v294
        %v379 = vmax.f32 %v293, %v295
        %v380 = vmax.f32 %v378, %v296
        %v381 = vmax.f32 %v379, %v297
        %v382 = vmax.f32 %v380, %v298
        %v383 = vmax.f32 %v381, %v299
        %v384 = vsel %vm314, %v382, -inf
        %v385 = vrot.slane %v384, 4
        %v386 = vmax.f32 %v384, %v385
        %v387 = vrot.slane %v386, 2
        %v388 = vmax.f32 %v386, %v387
        %v389 = vrot.slane %v388, 1
        %v390 = vmax.f32 %v388, %v389
        %v391 = vsel %vm322, %v382, -inf
        %v392 = vrot.slane %v391, 4
        %v393 = vmax.f32 %v391, %v392
        %v394 = vrot.slane %v393, 2
        %v395 = vmax.f32 %v393, %v394
        %v396 = vrot.slane %v395, 1
        %v397 = vmax.f32 %v395, %v396
        %v398 = vsel %vm314, %v383, -inf
        %v399 = vrot.slane %v398, 4
        %v400 = vmax.f32 %v398, %v399
        %v401 = vrot.slane %v400, 2
        %v402 = vmax.f32 %v400, %v401
        %v403 = vrot.slane %v402, 1
        %v404 = vmax.f32 %v402, %v403
        %v405 = vsel %vm322, %v383, -inf
        %v406 = vrot.slane %v405, 4
        %v407 = vmax.f32 %v405, %v406
        %v408 = vrot.slane %v407, 2
        %v409 = vmax.f32 %v407, %v408
        %v410 = vrot.slane %v409, 1
        %v411 = vmax.f32 %v409, %v410
        %v412 = vmax.f32 %v300, %v302
        %v413 = vmax.f32 %v301, %v303
        %v414 = vmax.f32 %v412, %v304
        %v415 = vmax.f32 %v413, %v305
        %v416 = vmax.f32 %v414, %v306
        %v417 = vmax.f32 %v415, %v307
        %v418 = vsel %vm314, %v416, -inf
        %v419 = vrot.slane %v418, 4
        %v420 = vmax.f32 %v418, %v419
        %v421 = vrot.slane %v420, 2
        %v422 = vmax.f32 %v420, %v421
        %v423 = vrot.slane %v422, 1
        %v424 = vmax.f32 %v422, %v423
        %v425 = vsel %vm322, %v416, -inf
        %v426 = vrot.slane %v425, 4
        %v427 = vmax.f32 %v425, %v426
        %v428 = vrot.slane %v427, 2
        %v429 = vmax.f32 %v427, %v428
        %v430 = vrot.slane %v429, 1
        %v431 = vmax.f32 %v429, %v430
        %v432 = vsel %vm314, %v417, -inf
        %v433 = vrot.slane %v432, 4
        %v434 = vmax.f32 %v432, %v433
        %v435 = vrot.slane %v434, 2
        %v436 = vmax.f32 %v434, %v435
        %v437 = vrot.slane %v436, 1
        %v438 = vmax.f32 %v436, %v437
        %v439 = vsel %vm322, %v417, -inf
        %v440 = vrot.slane %v439, 4
        %v441 = vmax.f32 %v439, %v440
        %v442 = vrot.slane %v441, 2
        %v443 = vmax.f32 %v441, %v442
        %v444 = vrot.slane %v443, 1
        %v445 = vmax.f32 %v443, %v444
        %vm446 = vcmask 1040384
        %v447 = vsel %vm446, %v321, %v329
        %vm448 = vcmask 1041408
        %v449 = vsel %vm448, %v447, %v336
        %vm450 = vcmask 1042432
        %v451 = vsel %vm450, %v449, %v343
        %vm452 = vcmask 1043456
        %v453 = vsel %vm452, %v451, %v356
        %vm454 = vcmask 1044480
        %v455 = vsel %vm454, %v453, %v363
        %vm456 = vcmask 1045504
        %v457 = vsel %vm456, %v455, %v370
        %vm458 = vcmask 1046528
        %v459 = vsel %vm458, %v457, %v377
        %v460 = vsel %vm446, %v390, %v397
        %v461 = vsel %vm448, %v460, %v404
        %v462 = vsel %vm450, %v461, %v411
        %v463 = vsel %vm452, %v462, %v424
        %v464 = vsel %vm454, %v463, %v431
        %v465 = vsel %vm456, %v464, %v438
        %v466 = vsel %vm458, %v465, %v445
        %467 = vxpose.xlu0.b32.start [1/16] %v459, 128
        %468 = vxpose.xlu0.b32.cont [2/16] %v466, 128
        %469 = vxpose.xlu0.b32.cont [3/16] 0.0, 128
        %470 = vxpose.xlu0.b32.cont [4/16] 0.0, 128
        %471 = vxpose.xlu0.b32.cont [5/16] 0.0, 128
        %472 = vxpose.xlu0.b32.cont [6/16] 0.0, 128
        %473 = vxpose.xlu0.b32.cont [7/16] 0.0, 128
        %474 = vxpose.xlu0.b32.cont [8/16] 0.0, 128
        %475 = vxpose.xlu0.b32.cont [9/16] 0.0, 128
        %476 = vxpose.xlu0.b32.cont [10/16] 0.0, 128
        %477 = vxpose.xlu0.b32.cont [11/16] 0.0, 128
        %478 = vxpose.xlu0.b32.cont [12/16] 0.0, 128
        %479 = vxpose.xlu0.b32.cont [13/16] 0.0, 128
        %480 = vxpose.xlu0.b32.cont [14/16] 0.0, 128
        %481 = vxpose.xlu0.b32.cont [15/16] 0.0, 128
        %482 = vxpose.xlu0.b32.end [16/16] 0.0, 128
        %v483 = vpop.trf.xlu0
        %v484 = vpop.trf.xlu0
        %v485 = vpop.trf.xlu0
        %v486 = vpop.trf.xlu0
        %v487 = vpop.trf.xlu0
        %v488 = vpop.trf.xlu0
        %v489 = vpop.trf.xlu0
        %v490 = vpop.trf.xlu0
        %v491 = vpop.trf.xlu0
        %v492 = vpop.trf.xlu0
        %v493 = vpop.trf.xlu0
        %v494 = vpop.trf.xlu0
        %v495 = vpop.trf.xlu0
        %v496 = vpop.trf.xlu0
        %v497 = vpop.trf.xlu0
        %v498 = vpop.trf.xlu0
        %vm499 = vcmask 130048
        %500 = vst.msk [vmem:[%s209] sm:$0xff] %vm499, %v483
        %v502 = vrot.slane %v459, 1
        %v504 = vmax.f32 %v459, %v502
        %v505 = vrot.slane %v459, 4
        %v507 = vmax.f32 %v504, %v505
        %v508 = vrot.slane %v459, 5
        %v510 = vmax.f32 %v507, %v508
        %v512 = vrot.slane %v466, 1
        %v514 = vmax.f32 %v466, %v512
        %v515 = vrot.slane %v466, 4
        %v517 = vmax.f32 %v514, %v515
        %v518 = vrot.slane %v466, 5
        %v520 = vmax.f32 %v517, %v518
        %v522 = vrot.slane %v510, 1
        %v525 = vrot.slane %v520, 6
        %v527 = vrot.slane %v520, 7
        %v529 = vsel %vm446, %v510, %v522
        %v530 = vsel %vm448, %v529, %v525
        %v531 = vsel %vm450, %v530, %v527
        %532 = vxpose.xlu0.b32.start [1/16] %v531, 128
        %533 = vxpose.xlu0.b32.cont [2/16] 0.0, 128
        %534 = vxpose.xlu0.b32.cont [3/16] 0.0, 128
        %535 = vxpose.xlu0.b32.cont [4/16] 0.0, 128
        %536 = vxpose.xlu0.b32.cont [5/16] 0.0, 128
        %537 = vxpose.xlu0.b32.cont [6/16] 0.0, 128
        %538 = vxpose.xlu0.b32.cont [7/16] 0.0, 128
        %539 = vxpose.xlu0.b32.cont [8/16] 0.0, 128
        %540 = vxpose.xlu0.b32.cont [9/16] 0.0, 128
        %541 = vxpose.xlu0.b32.cont [10/16] 0.0, 128
        %542 = vxpose.xlu0.b32.cont [11/16] 0.0, 128
        %543 = vxpose.xlu0.b32.cont [12/16] 0.0, 128
        %544 = vxpose.xlu0.b32.cont [13/16] 0.0, 128
        %545 = vxpose.xlu0.b32.cont [14/16] 0.0, 128
        %546 = vxpose.xlu0.b32.cont [15/16] 0.0, 128
        %547 = vxpose.xlu0.b32.end [16/16] 0.0, 128
        %v548 = vpop.trf.xlu0
        %v549 = vpop.trf.xlu0
        %v550 = vpop.trf.xlu0
        %v551 = vpop.trf.xlu0
        %v552 = vpop.trf.xlu0
        %v553 = vpop.trf.xlu0
        %v554 = vpop.trf.xlu0
        %v555 = vpop.trf.xlu0
        %v556 = vpop.trf.xlu0
        %v557 = vpop.trf.xlu0
        %v558 = vpop.trf.xlu0
        %v559 = vpop.trf.xlu0
        %v560 = vpop.trf.xlu0
        %v561 = vpop.trf.xlu0
        %v562 = vpop.trf.xlu0
        %v563 = vpop.trf.xlu0
        %vm564 = vcmask 31744
        %565 = vst.msk [vmem:[%s234] sm:$0xff] %vm564, %v548
        %v567 = vrot.slane %v531, 1
        %v569 = vmax.f32 %v531, %v567
        %v570 = vrot.slane %v531, 2
        %v572 = vmax.f32 %v569, %v570
        %v573 = vrot.slane %v531, 3
        %v575 = vmax.f32 %v572, %v573
        %576 = vxpose.xlu0.b32.start [1/16] %v575, 128
        %577 = vxpose.xlu0.b32.cont [2/16] 0.0, 128
        %578 = vxpose.xlu0.b32.cont [3/16] 0.0, 128
        %579 = vxpose.xlu0.b32.cont [4/16] 0.0, 128
        %580 = vxpose.xlu0.b32.cont [5/16] 0.0, 128
        %581 = vxpose.xlu0.b32.cont [6/16] 0.0, 128
        %582 = vxpose.xlu0.b32.cont [7/16] 0.0, 128
        %583 = vxpose.xlu0.b32.cont [8/16] 0.0, 128
        %584 = vxpose.xlu0.b32.cont [9/16] 0.0, 128
        %585 = vxpose.xlu0.b32.cont [10/16] 0.0, 128
        %586 = vxpose.xlu0.b32.cont [11/16] 0.0, 128
        %587 = vxpose.xlu0.b32.cont [12/16] 0.0, 128
        %588 = vxpose.xlu0.b32.cont [13/16] 0.0, 128
        %589 = vxpose.xlu0.b32.cont [14/16] 0.0, 128
        %590 = vxpose.xlu0.b32.cont [15/16] 0.0, 128
        %591 = vxpose.xlu0.b32.end [16/16] 0.0, 128
        %v592 = vpop.trf.xlu0
        %v593 = vpop.trf.xlu0
        %v594 = vpop.trf.xlu0
        %v595 = vpop.trf.xlu0
        %v596 = vpop.trf.xlu0
        %v597 = vpop.trf.xlu0
        %v598 = vpop.trf.xlu0
        %v599 = vpop.trf.xlu0
        %v600 = vpop.trf.xlu0
        %v601 = vpop.trf.xlu0
        %v602 = vpop.trf.xlu0
        %v603 = vpop.trf.xlu0
        %v604 = vpop.trf.xlu0
        %v605 = vpop.trf.xlu0
        %v606 = vpop.trf.xlu0
        %v607 = vpop.trf.xlu0
        %vm608 = vcmask 7168
        %609 = vst.msk [vmem:[%s241] sm:$0xff] %vm608, %v592
        %s610 = sand.u32 %s71, 1
        %s611 = scalar_lea.sflag [#allocation4], %s610
        %s612 = sand.u32 %s71, 1
        %s613 = smul.addr %s612, 8
        %s614 = scalar_lea.vmem [#allocation5], %s613
        %p615 = scmp.lt.s32.totalorder %s25, 1
        %s616 = scalar_select %p615, %s25, 1
        %p617 = scmp.lt.s32.totalorder %s26, 0
        %s618 = scalar_select %p617, %s26, 0
        %s619 = sadd.s32 %s618, %s616
        %s620 = smul.addr %s619, 8
        %s621 = scalar_lea.vmem %s2, %s620
        %p622 = scmp.lt.s32.totalorder %s25, 1
        %s623 = scalar_select %p622, %s25, 1
        %p624 = scmp.lt.s32.totalorder %s26, 0
        %s625 = scalar_select %p624, %s26, 0
        %s626 = sadd.s32 %s625, %s623
        %s627 = smul.addr %s626, 8
        %s628 = scalar_lea.vmem %s3, %s627
        // Predicated region
        $region29: #{tpu_custom_call.1} parent=23 // pred_check
          %p629 = pneg %p81
        $region30: #{tpu_custom_call.1} parent=23 // pred_check_branch
          %631 = sbr.rel (%p629) target = $region32
        $region31: #{tpu_custom_call.1} parent=23 // pred_region
          %s633 = ssub.s32 128, 128
          %634 = vsyncadd %s611, %s633
          %s635 = sadd.s32 %s26, %s25
          %s636 = smul.addr %s635, 128
          %s637 = scalar_lea.hbm %s1, %s636
          %s639 = sshll.u32 %s614, 4
          %s640 = int_to_ptr.vmem [resolvable:$true] %s639
          %642 = dma.vmem_to_hbm [thread:$0]  %s640, 128, %s637, %s611
        $region32: #{tpu_custom_call.1} parent=23 // pred_fallthru
          _
        // Predicated region
        $region33: #{tpu_custom_call.1} parent=23 // pred_check
          %p643 = pneg %p109
        $region34: #{tpu_custom_call.1} parent=23 // pred_check_branch
          %645 = sbr.rel (%p643) target = $region36
        $region35: #{tpu_custom_call.1} parent=23 // pred_region
          _
        $region36: #{tpu_custom_call.1} parent=23 // pred_fallthru
          _
        // Predicated region
        $region37: #{tpu_custom_call.1} parent=23 // pred_check
          %p646 = pneg %p137
        $region38: #{tpu_custom_call.1} parent=23 // pred_check_branch
          %648 = sbr.rel (%p646) target = $region40
        $region39: #{tpu_custom_call.1} parent=23 // pred_region
          _
        $region40: #{tpu_custom_call.1} parent=23 // pred_fallthru
          _
      $region24: #{tpu_custom_call.1} parent=5 // pred_fallthru
        _
      %p649 = scmp.le.s32.totalorder 2, %s16
      // Predicated region
      $region41: #{tpu_custom_call.1} parent=5 // pred_check
        %p650 = pneg %p649
      $region42: #{tpu_custom_call.1} parent=5 // pred_check_branch
        %652 = sbr.rel (%p650) target = $region44
      $region43: #{tpu_custom_call.1} parent=5 // pred_region
        %s653 = ssub.s32 %s16, 2
        // Predicated region
        $region45: #{tpu_custom_call.1} parent=43 // pred_check
          %p654 = pneg %p87
        $region46: #{tpu_custom_call.1} parent=43 // pred_check_branch
          %656 = sbr.rel (%p654) target = $region48
        $region47: #{tpu_custom_call.1} parent=43 // pred_region
          %s657 = sand.u32 %s72, 1
          %s658 = scalar_lea.sflag [#allocation4], %s657
          %s659 = sand.u32 %s72, 1
          %s660 = smul.addr %s659, 8
          %s661 = scalar_lea.vmem [#allocation5], %s660
          %662 = dma.done %s658, 128
        $region48: #{tpu_custom_call.1} parent=43 // pred_fallthru
          _
        // Predicated region
        $region49: #{tpu_custom_call.1} parent=43 // pred_check
          %p663 = pneg %p115
        $region50: #{tpu_custom_call.1} parent=43 // pred_check_branch
          %665 = sbr.rel (%p663) target = $region52
        $region51: #{tpu_custom_call.1} parent=43 // pred_region
          %p666 = scmp.lt.s32.totalorder %s27, 1
          %s667 = scalar_select %p666, %s27, 1
          %p668 = scmp.lt.s32.totalorder %s28, 0
          %s669 = scalar_select %p668, %s28, 0
          %s670 = sadd.s32 %s669, %s667
          %s671 = smul.addr %s670, 8
          %s672 = scalar_lea.vmem %s2, %s671
        $region52: #{tpu_custom_call.1} parent=43 // pred_fallthru
          _
        // Predicated region
        $region53: #{tpu_custom_call.1} parent=43 // pred_check
          %p673 = pneg %p143
        $region54: #{tpu_custom_call.1} parent=43 // pred_check_branch
          %675 = sbr.rel (%p673) target = $region56
        $region55: #{tpu_custom_call.1} parent=43 // pred_region
          %p676 = scmp.lt.s32.totalorder %s27, 1
          %s677 = scalar_select %p676, %s27, 1
          %p678 = scmp.lt.s32.totalorder %s28, 0
          %s679 = scalar_select %p678, %s28, 0
          %s680 = sadd.s32 %s679, %s677
          %s681 = smul.addr %s680, 8
          %s682 = scalar_lea.vmem %s3, %s681
        $region56: #{tpu_custom_call.1} parent=43 // pred_fallthru
          _
      $region44: #{tpu_custom_call.1} parent=5 // pred_fallthru
        _
    $region6: #{tpu_custom_call.1} parent=1 // loop_footer
      %s20 = sadd.s32 1, %s16
    $region7: #{tpu_custom_call.1} parent=1 // loop_footer_branch
      %15 = sbr.rel target = $region3
    $region8: #{tpu_custom_call.1} parent=1 // loop_exit
      _
    %683 = vsyncpa [#allocation3], 1
    %s684 = scalar_lea.sflag [#allocation3], 1
    %685 = vsyncpa %s684, 1
    %686 = vsyncpa [#allocation4], 1
    %s687 = scalar_lea.sflag [#allocation4], 1
    %688 = vsyncpa %s687, 1

</llo_original>
